<compile_context>
chip_gen: v5e
topology: v5e:2x2
jax: 0.10.0
libtpu: 0.0.40
codegen_flags: <defaults>
</compile_context>

<pallas_src>
import jax
import jax.numpy as jnp
from jax.experimental import pallas as pl
from jax.experimental.pallas import tpu as pltpu

KSIZE = 7
PAD = KSIZE // 2


def cs_attention_kernel(x_ref, w1_ref, w2_ref, wm_ref, o_ref):
    """x_ref/o_ref: (TB, C, HW); w1_ref: (C, hid); w2_ref: (hid, C); wm_ref: (2, HW, HW)."""
    x = x_ref[...].astype(jnp.float32)                 # (TB, C, HW) — single upcast
    TB, C, HW = x.shape

    # ---------------- Channel attention (squeeze-excite, no biases) ----------------
    pooled = jnp.mean(x, axis=2)                       # (TB, C) global avg pool
    h = jnp.maximum(
        jnp.dot(pooled, w1_ref[...], preferred_element_type=jnp.float32), 0.0)  # (TB, hid)
    yc = jax.nn.sigmoid(
        jnp.dot(h, w2_ref[...], preferred_element_type=jnp.float32))            # (TB, C)

    # ---------------- Spatial attention ----------------
    # Channel-mean / channel-max of the channel-scaled activations, computed as
    # a streaming reduction over channel chunks (x * yc is never materialized
    # as a full (TB, C, HW) temporary -> half the peak VMEM for bf16 inputs).
    avg_acc = jnp.zeros((TB, HW), jnp.float32)
    max_acc = jnp.full((TB, HW), -jnp.inf, jnp.float32)
    CCH = 8
    for c0 in range(0, C, CCH):
        c1 = min(C, c0 + CCH)
        chunk = x[:, c0:c1, :] * yc[:, c0:c1, None]    # (TB, <=CCH, HW)
        avg_acc = avg_acc + jnp.sum(chunk, axis=1)
        max_acc = jnp.maximum(max_acc, jnp.max(chunk, axis=1))
    avg_map = avg_acc * (1.0 / C)                      # (TB, HW)
    max_map = max_acc                                  # (TB, HW)

    # 7x7 zero-padded cross-correlation (nn.Conv2d semantics) as MXU matmuls
    # against the precomputed dense conv matrices (boundary masks baked in).
    conv = (jnp.dot(avg_map, wm_ref[0], preferred_element_type=jnp.float32)
            + jnp.dot(max_map, wm_ref[1], preferred_element_type=jnp.float32))  # (TB, HW)
    ys = jax.nn.sigmoid(conv)

    # Fused output: x * channel-gate * spatial-gate, single downcast store.
    o_ref[...] = (x * (yc[:, :, None] * ys[:, None, :])).astype(o_ref.dtype)


def _build_conv_matrices(wconv, H, W):
    """Dense (2, H*W, H*W) matrices implementing the zero-padded 7x7 'same' conv.

    out[b, p] = sum_ch sum_q in[ch][b, q] * M[ch, q, p]
    """
    HW = H * W
    pos = jnp.arange(HW)
    out_r = pos // W
    out_c = pos % W
    mats = []
    for ch in range(2):
        m = jnp.zeros((HW, HW), jnp.float32)
        for dy in range(-PAD, PAD + 1):
            for dx in range(-PAD, PAD + 1):
                w = wconv[ch, dy + PAD, dx + PAD]
                in_r = out_r + dy
                in_c = out_c + dx
                valid = (in_r >= 0) & (in_r < H) & (in_c >= 0) & (in_c < W)
                in_pos = jnp.clip(in_r, 0, H - 1) * W + jnp.clip(in_c, 0, W - 1)
                m = m.at[in_pos, pos].add(jnp.where(valid, w, 0.0))
        mats.append(m)
    return jnp.stack(mats)                             # (2, HW, HW)


def _pick_tb(batch, bytes_per_batch, target_bytes=6 * 1024 * 1024):
    """Largest divisor of `batch` whose block fits `target_bytes`; prefer multiples of 8
    so the (TB, H*W) conv operands use full sublanes."""
    divisors = [d for d in range(1, batch + 1) if batch % d == 0]
    fitting = [d for d in divisors if d * bytes_per_batch <= target_bytes] or [1]
    mult8 = [d for d in fitting if d % 8 == 0]
    return max(mult8) if mult8 else max(fitting)


def cs_attention(x, w1, w2, wconv, *, tb=None):
    """x: (B, C, H, W); w1: (C//r, C); w2: (C, C//r); wconv: (2, 7, 7). No biases anywhere."""
    B, C, H, W = x.shape
    hid = w1.shape[0]
    HW = H * W

    x_flat = x.reshape(B, C, HW)                       # lane-dense last dim
    w1_t = jnp.asarray(w1, jnp.float32).T              # (C, hid)
    w2_t = jnp.asarray(w2, jnp.float32).T              # (hid, C)
    wmat = _build_conv_matrices(jnp.asarray(wconv, jnp.float32), H, W)  # (2, HW, HW)
    # TODO(synk): for very large spatial sizes (H*W beyond ~48x48) the dense conv
    # matrix (2*HW^2*4 B of VMEM) gets too big; switch to a shared-roll tap conv there.

    # Per-batch VMEM footprint: in + out blocks plus the f32 working copy.
    bytes_per_batch = C * HW * (2 * x.dtype.itemsize + 4)
    if tb is None:
        tb = _pick_tb(B, bytes_per_batch)
    assert B % tb == 0, (B, tb)
    grid = (B // tb,)

    flops = B * (C * HW                                # global avg pool
                 + 4 * C * hid                         # the two FC matmuls
                 + 4 * C * HW                          # channel-scaled sum/max maps
                 + 2 * 2 * HW * HW                     # dense conv matmuls
                 + 2 * C * HW)                         # fused output scale
    cost = pl.CostEstimate(
        flops=int(flops),
        transcendentals=int(B * (C + HW)),             # sigmoids
        bytes_accessed=int(2 * B * C * HW * x.dtype.itemsize
                           + (2 * C * hid + 2 * HW * HW) * 4),
    )

    out_flat = pl.pallas_call(
        cs_attention_kernel,
        out_shape=jax.ShapeDtypeStruct((B, C, HW), x.dtype),
        grid=grid,
        in_specs=[
            pl.BlockSpec((tb, C, HW), lambda b: (b, 0, 0)),
            pl.BlockSpec((C, hid), lambda b: (0, 0)),
            pl.BlockSpec((hid, C), lambda b: (0, 0)),
            pl.BlockSpec((2, HW, HW), lambda b: (0, 0, 0)),
        ],
        out_specs=pl.BlockSpec((tb, C, HW), lambda b: (b, 0, 0)),
        compiler_params=pltpu.CompilerParams(
            dimension_semantics=("parallel",),
            vmem_limit_bytes=48 * 1024 * 1024,         # <= v7x 64 MiB/TC; plenty on v5e/v6e
        ),
        cost_estimate=cost,
    )(x_flat, w1_t, w2_t, wmat)

    return out_flat.reshape(B, C, H, W)


def cs_attention_reference(x, w1, w2, wconv):
    """Pure-JAX reference matching the PyTorch forward pass."""
    pooled = jnp.mean(x, axis=(2, 3))                  # (B, C)
    h = jax.nn.relu(pooled @ w1.T)                     # (B, hid)
    yc = jax.nn.sigmoid(h @ w2.T)                      # (B, C)
    x_ca = x * yc[:, :, None, None]

    avg_map = jnp.mean(x_ca, axis=1, keepdims=True)
    max_map = jnp.max(x_ca, axis=1, keepdims=True)
    stacked = jnp.concatenate([avg_map, max_map], axis=1)  # (B, 2, H, W)
    conv = jax.lax.conv_general_dilated(
        stacked, wconv[None], window_strides=(1, 1),
        padding=[(PAD, PAD), (PAD, PAD)],
        dimension_numbers=("NCHW", "OIHW", "NCHW"))
    ys = jax.nn.sigmoid(conv)                          # (B, 1, H, W)
    return x_ca * ys


if __name__ == "__main__":
    B, C, H, W = 2, 32, 16, 16
    reduction = 4
    hidden = C // reduction

    key = jax.random.PRNGKey(0)
    kx, k1, k2, k3 = jax.random.split(key, 4)
    x = jax.random.normal(kx, (B, C, H, W), dtype=jnp.float32)
    # Deterministic synthetic parameters (module __init__ shapes, no bias anywhere).
    w1 = jax.random.normal(k1, (hidden, C), dtype=jnp.float32) * 0.1        # Linear(C -> C//r)
    w2 = jax.random.normal(k2, (C, hidden), dtype=jnp.float32) * 0.1        # Linear(C//r -> C)
    wconv = jax.random.normal(k3, (2, KSIZE, KSIZE), dtype=jnp.float32) * 0.1  # Conv2d(2->1,7x7)

    # f32 path. Tolerance accommodates MXU bf16-pass matmuls on real hardware.
    out = jax.block_until_ready(cs_attention(x, w1, w2, wconv))
    ref = jax.block_until_ready(cs_attention_reference(x, w1, w2, wconv))
    assert out.shape == (B, C, H, W)
    assert jnp.allclose(out, ref, atol=5e-3, rtol=5e-3), float(jnp.max(jnp.abs(out - ref)))

    # bf16 I/O path (halves HBM traffic; math stays f32 in-kernel).
    xb = x.astype(jnp.bfloat16)
    out_b = jax.block_until_ready(cs_attention(xb, w1, w2, wconv))
    ref_b = cs_attention_reference(xb.astype(jnp.float32), w1, w2, wconv)
    assert out_b.dtype == jnp.bfloat16
    assert jnp.allclose(out_b.astype(jnp.float32), ref_b, atol=5e-2, rtol=5e-2)

    print("KERNEL_OK")
</pallas_src>

<mosaic_0001>
module attributes {stable_mosaic.version = 11 : i64} {
  func.func @cs_attention_kernel(%arg0: i32, %arg1: memref<2x32x256xf32, #tpu.memory_space<vmem>>, %arg2: memref<32x8xf32, #tpu.memory_space<vmem>>, %arg3: memref<8x32xf32, #tpu.memory_space<vmem>>, %arg4: memref<2x256x256xf32, #tpu.memory_space<vmem>>, %arg5: memref<2x32x256xf32, #tpu.memory_space<vmem>>) attributes {dimension_semantics = [#tpu.dimension_semantics<parallel>], iteration_bounds = array<i64: 1>, scalar_prefetch = 0 : i64, scratch_operands = 0 : i64, tpu.core_type = #tpu.core_type<tc>, window_params = [{transform_indices = @transform_0, window_bounds = array<i64: 2, 32, 256>}, {pipeline_mode = #tpu.pipeline_mode<synchronous>, transform_indices = @transform_1, window_bounds = array<i64: 32, 8>}, {pipeline_mode = #tpu.pipeline_mode<synchronous>, transform_indices = @transform_2, window_bounds = array<i64: 8, 32>}, {pipeline_mode = #tpu.pipeline_mode<synchronous>, transform_indices = @transform_3, window_bounds = array<i64: 2, 256, 256>}, {transform_indices = @transform_4, window_bounds = array<i64: 2, 32, 256>}]} {
    %c0 = arith.constant 0 : index
    %c0_0 = arith.constant 0 : index
    %c0_1 = arith.constant 0 : index
    %0 = vector.load %arg1[%c0, %c0_0, %c0_1] : memref<2x32x256xf32, #tpu.memory_space<vmem>>, vector<2x32x256xf32>
    %cst = arith.constant dense<0.000000e+00> : vector<2x32xf32>
    %1 = vector.multi_reduction <add>, %0, %cst [2] : vector<2x32x256xf32> to vector<2x32xf32>
    %cst_2 = arith.constant 2.560000e+02 : f32
    %2 = vector.broadcast %cst_2 : f32 to vector<2x32xf32>
    %3 = arith.divf %1, %2 : vector<2x32xf32>
    %c0_3 = arith.constant 0 : index
    %c0_4 = arith.constant 0 : index
    %4 = vector.load %arg2[%c0_3, %c0_4] : memref<32x8xf32, #tpu.memory_space<vmem>>, vector<32x8xf32>
    %cst_5 = arith.constant dense<0.000000e+00> : vector<2x8xf32>
    %5 = tpu.matmul %3, %4, %cst_5 {dimension_numbers = #tpu.dot_dimension_numbers<[1], [0], [0], [1], [0, 0, 1, 1], [], []>} : vector<2x32xf32>, vector<32x8xf32>, vector<2x8xf32> -> vector<2x8xf32>
    %cst_6 = arith.constant 0.000000e+00 : f32
    %6 = vector.broadcast %cst_6 : f32 to vector<2x8xf32>
    %7 = arith.maximumf %5, %6 : vector<2x8xf32>
    %c0_7 = arith.constant 0 : index
    %c0_8 = arith.constant 0 : index
    %8 = vector.load %arg3[%c0_7, %c0_8] : memref<8x32xf32, #tpu.memory_space<vmem>>, vector<8x32xf32>
    %cst_9 = arith.constant dense<0.000000e+00> : vector<2x32xf32>
    %9 = tpu.matmul %7, %8, %cst_9 {dimension_numbers = #tpu.dot_dimension_numbers<[1], [0], [0], [1], [0, 0, 1, 1], [], []>} : vector<2x8xf32>, vector<8x32xf32>, vector<2x32xf32> -> vector<2x32xf32>
    %10 = arith.negf %9 : vector<2x32xf32>
    %11 = math.exp %10 : vector<2x32xf32>
    %cst_10 = arith.constant 1.000000e+00 : f32
    %12 = vector.broadcast %cst_10 : f32 to vector<2x32xf32>
    %13 = arith.addf %12, %11 : vector<2x32xf32>
    %14 = arith.divf %12, %13 : vector<2x32xf32>
    %cst_11 = arith.constant 0.000000e+00 : f32
    %15 = vector.broadcast %cst_11 : f32 to vector<2x256xf32>
    %cst_12 = arith.constant 0xFF800000 : f32
    %16 = vector.broadcast %cst_12 : f32 to vector<2x256xf32>
    %17 = vector.extract_strided_slice %0 {offsets = [0, 0, 0], sizes = [2, 8, 256], strides = [1, 1, 1]} : vector<2x32x256xf32> to vector<2x8x256xf32>
    %18 = vector.extract_strided_slice %14 {offsets = [0, 0], sizes = [2, 8], strides = [1, 1]} : vector<2x32xf32> to vector<2x8xf32>
    %19 = vector.shape_cast %18 : vector<2x8xf32> to vector<2x8x1xf32>
    %20 = vector.broadcast %19 : vector<2x8x1xf32> to vector<2x8x256xf32>
    %21 = arith.mulf %17, %20 : vector<2x8x256xf32>
    %cst_13 = arith.constant dense<0.000000e+00> : vector<2x256xf32>
    %22 = vector.multi_reduction <add>, %21, %cst_13 [1] : vector<2x8x256xf32> to vector<2x256xf32>
    %23 = arith.addf %15, %22 : vector<2x256xf32>
    %cst_14 = arith.constant dense<0xFF800000> : vector<2x256xf32>
    %24 = vector.multi_reduction <maximumf>, %21, %cst_14 [1] : vector<2x8x256xf32> to vector<2x256xf32>
    %25 = arith.maximumf %16, %24 : vector<2x256xf32>
    %26 = vector.extract_strided_slice %0 {offsets = [0, 8, 0], sizes = [2, 8, 256], strides = [1, 1, 1]} : vector<2x32x256xf32> to vector<2x8x256xf32>
    %27 = vector.extract_strided_slice %14 {offsets = [0, 8], sizes = [2, 8], strides = [1, 1]} : vector<2x32xf32> to vector<2x8xf32>
    %28 = vector.shape_cast %27 : vector<2x8xf32> to vector<2x8x1xf32>
    %29 = vector.broadcast %28 : vector<2x8x1xf32> to vector<2x8x256xf32>
    %30 = arith.mulf %26, %29 : vector<2x8x256xf32>
    %cst_15 = arith.constant dense<0.000000e+00> : vector<2x256xf32>
    %31 = vector.multi_reduction <add>, %30, %cst_15 [1] : vector<2x8x256xf32> to vector<2x256xf32>
    %32 = arith.addf %23, %31 : vector<2x256xf32>
    %cst_16 = arith.constant dense<0xFF800000> : vector<2x256xf32>
    %33 = vector.multi_reduction <maximumf>, %30, %cst_16 [1] : vector<2x8x256xf32> to vector<2x256xf32>
    %34 = arith.maximumf %25, %33 : vector<2x256xf32>
    %35 = vector.extract_strided_slice %0 {offsets = [0, 16, 0], sizes = [2, 8, 256], strides = [1, 1, 1]} : vector<2x32x256xf32> to vector<2x8x256xf32>
    %36 = vector.extract_strided_slice %14 {offsets = [0, 16], sizes = [2, 8], strides = [1, 1]} : vector<2x32xf32> to vector<2x8xf32>
    %37 = vector.shape_cast %36 : vector<2x8xf32> to vector<2x8x1xf32>
    %38 = vector.broadcast %37 : vector<2x8x1xf32> to vector<2x8x256xf32>
    %39 = arith.mulf %35, %38 : vector<2x8x256xf32>
    %cst_17 = arith.constant dense<0.000000e+00> : vector<2x256xf32>
    %40 = vector.multi_reduction <add>, %39, %cst_17 [1] : vector<2x8x256xf32> to vector<2x256xf32>
    %41 = arith.addf %32, %40 : vector<2x256xf32>
    %cst_18 = arith.constant dense<0xFF800000> : vector<2x256xf32>
    %42 = vector.multi_reduction <maximumf>, %39, %cst_18 [1] : vector<2x8x256xf32> to vector<2x256xf32>
    %43 = arith.maximumf %34, %42 : vector<2x256xf32>
    %44 = vector.extract_strided_slice %0 {offsets = [0, 24, 0], sizes = [2, 8, 256], strides = [1, 1, 1]} : vector<2x32x256xf32> to vector<2x8x256xf32>
    %45 = vector.extract_strided_slice %14 {offsets = [0, 24], sizes = [2, 8], strides = [1, 1]} : vector<2x32xf32> to vector<2x8xf32>
    %46 = vector.shape_cast %45 : vector<2x8xf32> to vector<2x8x1xf32>
    %47 = vector.broadcast %46 : vector<2x8x1xf32> to vector<2x8x256xf32>
    %48 = arith.mulf %44, %47 : vector<2x8x256xf32>
    %cst_19 = arith.constant dense<0.000000e+00> : vector<2x256xf32>
    %49 = vector.multi_reduction <add>, %48, %cst_19 [1] : vector<2x8x256xf32> to vector<2x256xf32>
    %50 = arith.addf %41, %49 : vector<2x256xf32>
    %cst_20 = arith.constant dense<0xFF800000> : vector<2x256xf32>
    %51 = vector.multi_reduction <maximumf>, %48, %cst_20 [1] : vector<2x8x256xf32> to vector<2x256xf32>
    %52 = arith.maximumf %43, %51 : vector<2x256xf32>
    %cst_21 = arith.constant 3.125000e-02 : f32
    %53 = vector.broadcast %cst_21 : f32 to vector<2x256xf32>
    %54 = arith.mulf %50, %53 : vector<2x256xf32>
    %c0_22 = arith.constant 0 : index
    %c0_23 = arith.constant 0 : index
    %c0_24 = arith.constant 0 : index
    %55 = vector.load %arg4[%c0_22, %c0_23, %c0_24] : memref<2x256x256xf32, #tpu.memory_space<vmem>>, vector<1x256x256xf32>
    %56 = vector.shape_cast %55 : vector<1x256x256xf32> to vector<256x256xf32>
    %cst_25 = arith.constant dense<0.000000e+00> : vector<2x256xf32>
    %57 = tpu.matmul %54, %56, %cst_25 {dimension_numbers = #tpu.dot_dimension_numbers<[1], [0], [0], [1], [0, 0, 1, 1], [], []>} : vector<2x256xf32>, vector<256x256xf32>, vector<2x256xf32> -> vector<2x256xf32>
    %c1 = arith.constant 1 : index
    %c0_26 = arith.constant 0 : index
    %c0_27 = arith.constant 0 : index
    %58 = vector.load %arg4[%c1, %c0_26, %c0_27] : memref<2x256x256xf32, #tpu.memory_space<vmem>>, vector<1x256x256xf32>
    %59 = vector.shape_cast %58 : vector<1x256x256xf32> to vector<256x256xf32>
    %cst_28 = arith.constant dense<0.000000e+00> : vector<2x256xf32>
    %60 = tpu.matmul %52, %59, %cst_28 {dimension_numbers = #tpu.dot_dimension_numbers<[1], [0], [0], [1], [0, 0, 1, 1], [], []>} : vector<2x256xf32>, vector<256x256xf32>, vector<2x256xf32> -> vector<2x256xf32>
    %61 = arith.addf %57, %60 : vector<2x256xf32>
    %62 = arith.negf %61 : vector<2x256xf32>
    %63 = math.exp %62 : vector<2x256xf32>
    %cst_29 = arith.constant 1.000000e+00 : f32
    %64 = vector.broadcast %cst_29 : f32 to vector<2x256xf32>
    %65 = arith.addf %64, %63 : vector<2x256xf32>
    %66 = arith.divf %64, %65 : vector<2x256xf32>
    %67 = vector.shape_cast %14 : vector<2x32xf32> to vector<2x32x1xf32>
    %68 = vector.shape_cast %66 : vector<2x256xf32> to vector<2x1x256xf32>
    %69 = vector.broadcast %67 : vector<2x32x1xf32> to vector<2x32x256xf32>
    %70 = vector.broadcast %68 : vector<2x1x256xf32> to vector<2x32x256xf32>
    %71 = arith.mulf %69, %70 : vector<2x32x256xf32>
    %72 = arith.mulf %0, %71 : vector<2x32x256xf32>
    %c0_30 = arith.constant 0 : index
    %c0_31 = arith.constant 0 : index
    %c0_32 = arith.constant 0 : index
    %73 = vector.load %arg5[%c0_30, %c0_31, %c0_32] : memref<2x32x256xf32, #tpu.memory_space<vmem>>, vector<2x32x256xf32>
    tpu.vector_store %arg5[%c0_30, %c0_31, %c0_32], %72 {strides = array<i32>} : memref<2x32x256xf32, #tpu.memory_space<vmem>>, vector<2x32x256xf32>,
    return
  }
  func.func @transform_0(%arg0: i32) -> (i32, i32, i32) {
    %c0_i32 = arith.constant 0 : i32
    %c0_i32_0 = arith.constant 0 : i32
    %c0_i32_1 = arith.constant 0 : i32
    return %arg0, %c0_i32, %c0_i32_0 : i32, i32, i32
  }
  func.func @transform_1(%arg0: i32) -> (i32, i32) {
    %c0_i32 = arith.constant 0 : i32
    %c0_i32_0 = arith.constant 0 : i32
    %c0_i32_1 = arith.constant 0 : i32
    return %c0_i32, %c0_i32_0 : i32, i32
  }
  func.func @transform_2(%arg0: i32) -> (i32, i32) {
    %c0_i32 = arith.constant 0 : i32
    %c0_i32_0 = arith.constant 0 : i32
    %c0_i32_1 = arith.constant 0 : i32
    return %c0_i32, %c0_i32_0 : i32, i32
  }
  func.func @transform_3(%arg0: i32) -> (i32, i32, i32) {
    %c0_i32 = arith.constant 0 : i32
    %c0_i32_0 = arith.constant 0 : i32
    %c0_i32_1 = arith.constant 0 : i32
    %c0_i32_2 = arith.constant 0 : i32
    return %c0_i32, %c0_i32_0, %c0_i32_1 : i32, i32, i32
  }
  func.func @transform_4(%arg0: i32) -> (i32, i32, i32) {
    %c0_i32 = arith.constant 0 : i32
    %c0_i32_0 = arith.constant 0 : i32
    %c0_i32_1 = arith.constant 0 : i32
    return %arg0, %c0_i32, %c0_i32_0 : i32, i32, i32
  }
}

</mosaic_0001>

<llo_original>
// kernel: tpu_custom_call.1
$region0: #{tpu_custom_call.1}
  #allocation0 [shape = 'u32[]', space=smem, size = 0x4, offset = 0x4, fixed_abs, tag = 'smem constant byte address 0x4 - core index']
  #allocation1 [shape = 'u32[72,128]{1,0:T(1,128)}', space=vmem, size = 0x9000, scoped, tag = 'internal scratch']
  %s0 = inlined_call_operand.hbm [shape: f32[2,32,256], index: 0, kind: input, shape index: {}]
  %s1 = inlined_call_operand.vmem [shape: f32[32,8], index: 1, kind: input, shape index: {}]
  %s2 = inlined_call_operand.vmem [shape: f32[8,32], index: 2, kind: input, shape index: {}]
  %s3 = inlined_call_operand.hbm [shape: f32[2,256,256], index: 3, kind: input, shape index: {}]
  %s4 = inlined_call_operand.hbm [shape: f32[2,32,256], index: 4, kind: output, shape index: {}]
  %s5 = sld [smem:[#allocation0]]
  $region34: #{tpu_custom_call.1} parent=0
    _
  %s7 = ssub.s32 1, %s5
  %s8 = scalar_select 0, %s7, %s5
  $region1: #{tpu_custom_call.1} parent=0
    #allocation2 [shape = 'u8[65536]{0}', space=vmem, size = 0x10000, scoped, tag = 'input window, operand 0, single buffered']
    #allocation3 [shape = 's32[1]{0}', space=sflag, size = 0x4, scoped, tag = 'scoped memory for tpu_custom_call.1']
    #allocation4 [shape = 's32[1]{0}', space=sflag, size = 0x4, scoped, tag = 'scoped memory for tpu_custom_call.1']
    #allocation5 [shape = 'u8[524288]{0}', space=vmem, size = 0x80000, scoped, tag = 'input window, operand 3, single buffered']
    #allocation6 [shape = 's32[1]{0}', space=sflag, size = 0x4, scoped, tag = 'scoped memory for tpu_custom_call.1']
    #allocation7 [shape = 'u8[65536]{0}', space=vmem, size = 0x10000, scoped, tag = 'output window, operand 0, single buffered']
    %9 = vsyncpa [#allocation3], 0
    %10 = vsyncpa [#allocation6], 0
    %11 = vsyncpa [#allocation4], 0
    // Predicated region
    $region2: #{tpu_custom_call.1} parent=1 // pred_check
      _
    $region3: #{tpu_custom_call.1} parent=1 // pred_check_branch
      %13 = sbr.rel (0) target = $region5
    $region4: #{tpu_custom_call.1} parent=1 // pred_region
      %15 = vsyncadd [#allocation3], 0
      %s16 = sshll.u32 %s0, 4
      %s17 = int_to_ptr.hbm [resolvable:$true] %s16
      %s18 = sshll.u32 [#allocation2], 4
      %s19 = int_to_ptr.vmem [resolvable:$true] %s18
      %24 = dma.hbm_to_vmem [thread:$0]  %s17, 2048, %s19, [#allocation3], 256, 256, 16
    $region5: #{tpu_custom_call.1} parent=1 // pred_fallthru
      _
    // Predicated region
    $region6: #{tpu_custom_call.1} parent=1 // pred_check
      _
    $region7: #{tpu_custom_call.1} parent=1 // pred_check_branch
      %26 = sbr.rel (0) target = $region9
    $region8: #{tpu_custom_call.1} parent=1 // pred_region
      _
    $region9: #{tpu_custom_call.1} parent=1 // pred_fallthru
      _
    // Predicated region
    $region10: #{tpu_custom_call.1} parent=1 // pred_check
      _
    $region11: #{tpu_custom_call.1} parent=1 // pred_check_branch
      %28 = sbr.rel (0) target = $region13
    $region12: #{tpu_custom_call.1} parent=1 // pred_region
      _
    $region13: #{tpu_custom_call.1} parent=1 // pred_fallthru
      _
    // Predicated region
    $region14: #{tpu_custom_call.1} parent=1 // pred_check
      _
    $region15: #{tpu_custom_call.1} parent=1 // pred_check_branch
      %30 = sbr.rel (0) target = $region17
    $region16: #{tpu_custom_call.1} parent=1 // pred_region
      %32 = vsyncadd [#allocation6], 0
      %s33 = sshll.u32 %s3, 4
      %s34 = int_to_ptr.hbm [resolvable:$true] %s33
      %s35 = sshll.u32 [#allocation5], 4
      %s36 = int_to_ptr.vmem [resolvable:$true] %s35
      %41 = dma.hbm_to_vmem [thread:$0]  %s34, 16384, %s36, [#allocation6], 256, 256, 16
    $region17: #{tpu_custom_call.1} parent=1 // pred_fallthru
      _
    // Predicated region
    $region18: #{tpu_custom_call.1} parent=1 // pred_check
      _
    $region19: #{tpu_custom_call.1} parent=1 // pred_check_branch
      %43 = sbr.rel (0) target = $region21
    $region20: #{tpu_custom_call.1} parent=1 // pred_region
      %45 = dma.done [#allocation3], 2048
    $region21: #{tpu_custom_call.1} parent=1 // pred_fallthru
      _
    // Predicated region
    $region22: #{tpu_custom_call.1} parent=1 // pred_check
      _
    $region23: #{tpu_custom_call.1} parent=1 // pred_check_branch
      %47 = sbr.rel (0) target = $region25
    $region24: #{tpu_custom_call.1} parent=1 // pred_region
      %49 = dma.done [#allocation6], 16384
    $region25: #{tpu_custom_call.1} parent=1 // pred_fallthru
      _
    %v50 = vld [vmem:[#allocation2] sm:$0xff]
    %v51 = vld [vmem:[#allocation2 + $0x8] sm:$0xff]
    %v52 = vld [vmem:[#allocation2 + $0x10] sm:$0xff]
    %v53 = vld [vmem:[#allocation2 + $0x18] sm:$0xff]
    %v54 = vld [vmem:[#allocation2 + $0x20] sm:$0xff]
    %v55 = vld [vmem:[#allocation2 + $0x28] sm:$0xff]
    %v56 = vld [vmem:[#allocation2 + $0x30] sm:$0xff]
    %v57 = vld [vmem:[#allocation2 + $0x38] sm:$0xff]
    %v58 = vld [vmem:[#allocation2 + $0x40] sm:$0xff]
    %v59 = vld [vmem:[#allocation2 + $0x48] sm:$0xff]
    %v60 = vld [vmem:[#allocation2 + $0x50] sm:$0xff]
    %v61 = vld [vmem:[#allocation2 + $0x58] sm:$0xff]
    %v62 = vld [vmem:[#allocation2 + $0x60] sm:$0xff]
    %v63 = vld [vmem:[#allocation2 + $0x68] sm:$0xff]
    %v64 = vld [vmem:[#allocation2 + $0x70] sm:$0xff]
    %v65 = vld [vmem:[#allocation2 + $0x78] sm:$0xff]
    %v66 = vadd.f32 %v50, %v51
    %67 = vadd.xlane.f32.xlu0 %v66
    %v68 = vpop.xlane.xlu0 %67
    %v69 = vadd.f32 %v52, %v53
    %70 = vadd.xlane.f32.xlu0 %v69
    %v71 = vpop.xlane.xlu0 %70
    %v72 = vadd.f32 %v54, %v55
    %73 = vadd.xlane.f32.xlu0 %v72
    %v74 = vpop.xlane.xlu0 %73
    %v75 = vadd.f32 %v56, %v57
    %76 = vadd.xlane.f32.xlu0 %v75
    %v77 = vpop.xlane.xlu0 %76
    %v78 = vadd.f32 %v58, %v59
    %79 = vadd.xlane.f32.xlu0 %v78
    %v80 = vpop.xlane.xlu0 %79
    %v81 = vadd.f32 %v60, %v61
    %82 = vadd.xlane.f32.xlu0 %v81
    %v83 = vpop.xlane.xlu0 %82
    %v84 = vadd.f32 %v62, %v63
    %85 = vadd.xlane.f32.xlu0 %v84
    %v86 = vpop.xlane.xlu0 %85
    %v87 = vadd.f32 %v64, %v65
    %88 = vadd.xlane.f32.xlu0 %v87
    %v89 = vpop.xlane.xlu0 %88
    %v90 = vrcp.pop 256.0
    %v91 = vmul.f32 256.0, %v90
    %v92 = vsub.f32 1.0, %v91
    %v93 = vmul.f32 %v90, %v92
    %v94 = vadd.f32 %v90, %v93
    %vm95 = vweird.f32 %v90
    %v96 = vsel %vm95, %v90, %v94
    %v97 = vmul.f32 %v68, %v96
    %v98 = vmul.f32 %v71, %v96
    %v99 = vmul.f32 %v74, %v96
    %v100 = vmul.f32 %v77, %v96
    %v101 = vmul.f32 %v80, %v96
    %v102 = vmul.f32 %v83, %v96
    %v103 = vmul.f32 %v86, %v96
    %v104 = vmul.f32 %v89, %v96
    %v105 = vld [vmem:[%s1] sm:$0xff]
    %v106 = vld [vmem:[%s1 + $0x8] sm:$0xff]
    %v107 = vld [vmem:[%s1 + $0x10] sm:$0xff]
    %v108 = vld [vmem:[%s1 + $0x18] sm:$0xff]
    %v117 = vlaneseq
    %v118 = vand.u32 %v117, 127
    %v119 = vperm.slane %v97, %v118
    %v120 = vadd.s32 %v118, 4294967288
    %v121 = vperm.slane %v98, %v120
    %vm122 = vcmask 130112
    %v123 = vsel %vm122, %v121, %v119
    %v124 = vadd.s32 %v118, 4294967280
    %v125 = vperm.slane %v99, %v124
    %vm126 = vcmask 195712
    %v127 = vsel %vm126, %v125, %v123
    %v128 = vadd.s32 %v118, 4294967272
    %v129 = vperm.slane %v100, %v128
    %vm130 = vcmask 261312
    %v131 = vsel %vm130, %v129, %v127
    %v132 = vperm.slane %v101, %v118
    %v133 = vperm.slane %v102, %v120
    %v134 = vsel %vm122, %v133, %v132
    %v135 = vperm.slane %v103, %v124
    %v136 = vsel %vm126, %v135, %v134
    %v137 = vperm.slane %v104, %v128
    %v138 = vsel %vm130, %v137, %v136
    %vm139 = vcmask 1041409
    %v140 = vsel %vm139, %v138, %v131
    %vm141 = vcmask 261120
    %v142 = vsel %vm141, %v140, 0
    %144 = vmatpush.msra.mxu0 0.0
    %145 = vmatpush.msra.mxu0 0.0
    %146 = vmatpush.msra.mxu0 0.0
    %147 = vmatpush.msra.mxu0 0.0
    %148 = vmatpush.msra.mxu0 0.0
    %149 = vmatpush.msra.mxu0 0.0
    %150 = vmatpush.msra.mxu0 0.0
    %151 = vmatpush.msra.mxu0 0.0
    %152 = vmatpush.msra.mxu0 0.0
    %153 = vmatpush.msra.mxu0 0.0
    %154 = vmatpush.msra.mxu0 0.0
    %155 = vmatpush.msra.mxu0 0.0
    %156 = vmatpush.msra.mxu0 %v108
    %157 = vmatpush.msra.mxu0 %v107
    %158 = vmatpush.msra.mxu0 %v106
    %159 = vmatpush.msra.mxu0 %v105
    %160 = vmatmul.f32.gmra.mxu0 %v142
    %v161 = vpop.f32.mrf.mxu0
    %v162 = vadd.f32 0.0, %v161
    %163 = vdwg.mxu0
    %v164 = vmax.f32 %v162, 0.0
    %v165 = vld [vmem:[%s2] sm:$0xff]
    %vm166 = vcmask 64512
    %v168 = vsel %vm166, %v164, 0
    %170 = vmatpush.msra.mxu0 0.0
    %171 = vmatpush.msra.mxu0 0.0
    %172 = vmatpush.msra.mxu0 0.0
    %173 = vmatpush.msra.mxu0 0.0
    %174 = vmatpush.msra.mxu0 0.0
    %175 = vmatpush.msra.mxu0 0.0
    %176 = vmatpush.msra.mxu0 0.0
    %177 = vmatpush.msra.mxu0 0.0
    %178 = vmatpush.msra.mxu0 0.0
    %179 = vmatpush.msra.mxu0 0.0
    %180 = vmatpush.msra.mxu0 0.0
    %181 = vmatpush.msra.mxu0 0.0
    %182 = vmatpush.msra.mxu0 0.0
    %183 = vmatpush.msra.mxu0 0.0
    %184 = vmatpush.msra.mxu0 0.0
    %185 = vmatpush.msra.mxu0 %v165
    %186 = vmatmul.f32.gmra.mxu0 %v168
    %v187 = vpop.f32.mrf.mxu0
    %v188 = vadd.f32 0.0, %v187
    %189 = vdwg.mxu0
    %v190 = vxor.u32 %v188, 2147483648
    %v191 = vmul.f32 %v190, 1.442695
    %v192 = vpow.pop %v191
    %v193 = vadd.f32 %v192, 1.0
    %v194 = vrcp.pop %v193
    %v195 = vmul.f32 %v193, %v194
    %v196 = vsub.f32 1.0, %v195
    %v197 = vmul.f32 %v194, %v196
    %v198 = vadd.f32 %v194, %v197
    %vm199 = vweird.f32 %v193
    %vm200 = vweird.f32 %v194
    %vm201 = vmor %vm199, %vm200
    %v202 = vsel %vm201, %v194, %v198
    %v203 = vand.u32 2147483647, %v193
    %vm204 = vcmp.eq.f32.partialorder %v203, 8.507059e+37
    %v205 = vand.u32 %v193, 2147483648
    %v206 = vor.u32 1.1754944e-38, %v205
    %v207 = vsel %vm204, %v206, %v202
    %v208 = vmul.f32 1.0, %v207
    %v209 = vperm.slane %v208, 0
    %v210 = vlaneseq
    %v211 = vshrl.u32 %v210, 7
    %213 = vset.pattern.permute.xlu0 %v211
    %214 = vperm.xlu0 %213, %v209
    %v215 = vpop.permute.xlu0 %214
    %v216 = vperm.slane %v208, 1
    %v217 = vlaneseq
    %v218 = vshrl.u32 %v217, 7
    %220 = vset.pattern.permute.xlu0 %v218
    %221 = vperm.xlu0 %220, %v216
    %v222 = vpop.permute.xlu0 %221
    %v223 = vmul.f32 %v50, %v215
    %v224 = vmul.f32 %v51, %v215
    %v225 = vmul.f32 %v58, %v222
    %v226 = vmul.f32 %v59, %v222
    %v227 = vrot.slane %v223, 4
    %v228 = vadd.f32 %v223, %v227
    %v229 = vrot.slane %v228, 2
    %v230 = vadd.f32 %v228, %v229
    %v231 = vrot.slane %v230, 1
    %v232 = vadd.f32 %v230, %v231
    %v233 = vrot.slane %v224, 4
    %v234 = vadd.f32 %v224, %v233
    %v235 = vrot.slane %v234, 2
    %v236 = vadd.f32 %v234, %v235
    %v237 = vrot.slane %v236, 1
    %v238 = vadd.f32 %v236, %v237
    %v239 = vrot.slane %v225, 4
    %v240 = vadd.f32 %v225, %v239
    %v241 = vrot.slane %v240, 2
    %v242 = vadd.f32 %v240, %v241
    %v243 = vrot.slane %v242, 1
    %v244 = vadd.f32 %v242, %v243
    %v245 = vrot.slane %v226, 4
    %v246 = vadd.f32 %v226, %v245
    %v247 = vrot.slane %v246, 2
    %v248 = vadd.f32 %v246, %v247
    %v249 = vrot.slane %v248, 1
    %v250 = vadd.f32 %v248, %v249
    %v251 = vadd.f32 %v232, 0.0
    %v252 = vadd.f32 %v238, 0.0
    %v253 = vadd.f32 %v244, 0.0
    %v254 = vadd.f32 %v250, 0.0
    %v255 = vrot.slane %v223, 4
    %v256 = vmax.f32 %v223, %v255
    %v257 = vrot.slane %v256, 2
    %v258 = vmax.f32 %v256, %v257
    %v259 = vrot.slane %v258, 1
    %v260 = vmax.f32 %v258, %v259
    %v261 = vrot.slane %v224, 4
    %v262 = vmax.f32 %v224, %v261
    %v263 = vrot.slane %v262, 2
    %v264 = vmax.f32 %v262, %v263
    %v265 = vrot.slane %v264, 1
    %v266 = vmax.f32 %v264, %v265
    %v267 = vrot.slane %v225, 4
    %v268 = vmax.f32 %v225, %v267
    %v269 = vrot.slane %v268, 2
    %v270 = vmax.f32 %v268, %v269
    %v271 = vrot.slane %v270, 1
    %v272 = vmax.f32 %v270, %v271
    %v273 = vrot.slane %v226, 4
    %v274 = vmax.f32 %v226, %v273
    %v275 = vrot.slane %v274, 2
    %v276 = vmax.f32 %v274, %v275
    %v277 = vrot.slane %v276, 1
    %v278 = vmax.f32 %v276, %v277
    %v279 = vlaneseq
    %v280 = vshrl.u32 %v279, 7
    %v281 = vadd.s32 %v280, 8
    %282 = vset.pattern.permute.xlu0 %v281
    %283 = vperm.xlu0 %282, %v209
    %v284 = vpop.permute.xlu0 %283
    %v285 = vlaneseq
    %v286 = vshrl.u32 %v285, 7
    %v287 = vadd.s32 %v286, 8
    %288 = vset.pattern.permute.xlu0 %v287
    %289 = vperm.xlu0 %288, %v216
    %v290 = vpop.permute.xlu0 %289
    %v291 = vmul.f32 %v52, %v284
    %v292 = vmul.f32 %v53, %v284
    %v293 = vmul.f32 %v60, %v290
    %v294 = vmul.f32 %v61, %v290
    %v295 = vrot.slane %v291, 4
    %v296 = vadd.f32 %v291, %v295
    %v297 = vrot.slane %v296, 2
    %v298 = vadd.f32 %v296, %v297
    %v299 = vrot.slane %v298, 1
    %v300 = vadd.f32 %v298, %v299
    %v301 = vrot.slane %v292, 4
    %v302 = vadd.f32 %v292, %v301
    %v303 = vrot.slane %v302, 2
    %v304 = vadd.f32 %v302, %v303
    %v305 = vrot.slane %v304, 1
    %v306 = vadd.f32 %v304, %v305
    %v307 = vrot.slane %v293, 4
    %v308 = vadd.f32 %v293, %v307
    %v309 = vrot.slane %v308, 2
    %v310 = vadd.f32 %v308, %v309
    %v311 = vrot.slane %v310, 1
    %v312 = vadd.f32 %v310, %v311
    %v313 = vrot.slane %v294, 4
    %v314 = vadd.f32 %v294, %v313
    %v315 = vrot.slane %v314, 2
    %v316 = vadd.f32 %v314, %v315
    %v317 = vrot.slane %v316, 1
    %v318 = vadd.f32 %v316, %v317
    %v319 = vadd.f32 %v251, %v300
    %v320 = vadd.f32 %v252, %v306
    %v321 = vadd.f32 %v253, %v312
    %v322 = vadd.f32 %v254, %v318
    %v323 = vrot.slane %v291, 4
    %v324 = vmax.f32 %v291, %v323
    %v325 = vrot.slane %v324, 2
    %v326 = vmax.f32 %v324, %v325
    %v327 = vrot.slane %v326, 1
    %v328 = vmax.f32 %v326, %v327
    %v329 = vrot.slane %v292, 4
    %v330 = vmax.f32 %v292, %v329
    %v331 = vrot.slane %v330, 2
    %v332 = vmax.f32 %v330, %v331
    %v333 = vrot.slane %v332, 1
    %v334 = vmax.f32 %v332, %v333
    %v335 = vrot.slane %v293, 4
    %v336 = vmax.f32 %v293, %v335
    %v337 = vrot.slane %v336, 2
    %v338 = vmax.f32 %v336, %v337
    %v339 = vrot.slane %v338, 1
    %v340 = vmax.f32 %v338, %v339
    %v341 = vrot.slane %v294, 4
    %v342 = vmax.f32 %v294, %v341
    %v343 = vrot.slane %v342, 2
    %v344 = vmax.f32 %v342, %v343
    %v345 = vrot.slane %v344, 1
    %v346 = vmax.f32 %v344, %v345
    %v347 = vmax.f32 %v260, %v328
    %v348 = vmax.f32 %v266, %v334
    %v349 = vmax.f32 %v272, %v340
    %v350 = vmax.f32 %v278, %v346
    %v351 = vlaneseq
    %v352 = vshrl.u32 %v351, 7
    %v353 = vadd.s32 %v352, 16
    %354 = vset.pattern.permute.xlu0 %v353
    %355 = vperm.xlu0 %354, %v209
    %v356 = vpop.permute.xlu0 %355
    %v357 = vlaneseq
    %v358 = vshrl.u32 %v357, 7
    %v359 = vadd.s32 %v358, 16
    %360 = vset.pattern.permute.xlu0 %v359
    %361 = vperm.xlu0 %360, %v216
    %v362 = vpop.permute.xlu0 %361
    %v363 = vmul.f32 %v54, %v356
    %v364 = vmul.f32 %v55, %v356
    %v365 = vmul.f32 %v62, %v362
    %v366 = vmul.f32 %v63, %v362
    %v367 = vrot.slane %v363, 4
    %v368 = vadd.f32 %v363, %v367
    %v369 = vrot.slane %v368, 2
    %v370 = vadd.f32 %v368, %v369
    %v371 = vrot.slane %v370, 1
    %v372 = vadd.f32 %v370, %v371
    %v373 = vrot.slane %v364, 4
    %v374 = vadd.f32 %v364, %v373
    %v375 = vrot.slane %v374, 2
    %v376 = vadd.f32 %v374, %v375
    %v377 = vrot.slane %v376, 1
    %v378 = vadd.f32 %v376, %v377
    %v379 = vrot.slane %v365, 4
    %v380 = vadd.f32 %v365, %v379
    %v381 = vrot.slane %v380, 2
    %v382 = vadd.f32 %v380, %v381
    %v383 = vrot.slane %v382, 1
    %v384 = vadd.f32 %v382, %v383
    %v385 = vrot.slane %v366, 4
    %v386 = vadd.f32 %v366, %v385
    %v387 = vrot.slane %v386, 2
    %v388 = vadd.f32 %v386, %v387
    %v389 = vrot.slane %v388, 1
    %v390 = vadd.f32 %v388, %v389
    %v391 = vadd.f32 %v319, %v372
    %v392 = vadd.f32 %v320, %v378
    %v393 = vadd.f32 %v321, %v384
    %v394 = vadd.f32 %v322, %v390
    %v395 = vrot.slane %v363, 4
    %v396 = vmax.f32 %v363, %v395
    %v397 = vrot.slane %v396, 2
    %v398 = vmax.f32 %v396, %v397
    %v399 = vrot.slane %v398, 1
    %v400 = vmax.f32 %v398, %v399
    %v401 = vrot.slane %v364, 4
    %v402 = vmax.f32 %v364, %v401
    %v403 = vrot.slane %v402, 2
    %v404 = vmax.f32 %v402, %v403
    %v405 = vrot.slane %v404, 1
    %v406 = vmax.f32 %v404, %v405
    %v407 = vrot.slane %v365, 4
    %v408 = vmax.f32 %v365, %v407
    %v409 = vrot.slane %v408, 2
    %v410 = vmax.f32 %v408, %v409
    %v411 = vrot.slane %v410, 1
    %v412 = vmax.f32 %v410, %v411
    %v413 = vrot.slane %v366, 4
    %v414 = vmax.f32 %v366, %v413
    %v415 = vrot.slane %v414, 2
    %v416 = vmax.f32 %v414, %v415
    %v417 = vrot.slane %v416, 1
    %v418 = vmax.f32 %v416, %v417
    %v419 = vmax.f32 %v347, %v400
    %v420 = vmax.f32 %v348, %v406
    %v421 = vmax.f32 %v349, %v412
    %v422 = vmax.f32 %v350, %v418
    %v423 = vlaneseq
    %v424 = vshrl.u32 %v423, 7
    %v425 = vadd.s32 %v424, 24
    %426 = vset.pattern.permute.xlu0 %v425
    %427 = vperm.xlu0 %426, %v209
    %v428 = vpop.permute.xlu0 %427
    %v429 = vlaneseq
    %v430 = vshrl.u32 %v429, 7
    %v431 = vadd.s32 %v430, 24
    %432 = vset.pattern.permute.xlu0 %v431
    %433 = vperm.xlu0 %432, %v216
    %v434 = vpop.permute.xlu0 %433
    %v435 = vmul.f32 %v56, %v428
    %v436 = vmul.f32 %v57, %v428
    %v437 = vmul.f32 %v64, %v434
    %v438 = vmul.f32 %v65, %v434
    %v439 = vrot.slane %v435, 4
    %v440 = vadd.f32 %v435, %v439
    %v441 = vrot.slane %v440, 2
    %v442 = vadd.f32 %v440, %v441
    %v443 = vrot.slane %v442, 1
    %v444 = vadd.f32 %v442, %v443
    %v445 = vrot.slane %v436, 4
    %v446 = vadd.f32 %v436, %v445
    %v447 = vrot.slane %v446, 2
    %v448 = vadd.f32 %v446, %v447
    %v449 = vrot.slane %v448, 1
    %v450 = vadd.f32 %v448, %v449
    %v451 = vrot.slane %v437, 4
    %v452 = vadd.f32 %v437, %v451
    %v453 = vrot.slane %v452, 2
    %v454 = vadd.f32 %v452, %v453
    %v455 = vrot.slane %v454, 1
    %v456 = vadd.f32 %v454, %v455
    %v457 = vrot.slane %v438, 4
    %v458 = vadd.f32 %v438, %v457
    %v459 = vrot.slane %v458, 2
    %v460 = vadd.f32 %v458, %v459
    %v461 = vrot.slane %v460, 1
    %v462 = vadd.f32 %v460, %v461
    %v463 = vadd.f32 %v391, %v444
    %v464 = vadd.f32 %v392, %v450
    %v465 = vadd.f32 %v393, %v456
    %v466 = vadd.f32 %v394, %v462
    %v467 = vrot.slane %v435, 4
    %v468 = vmax.f32 %v435, %v467
    %v469 = vrot.slane %v468, 2
    %v470 = vmax.f32 %v468, %v469
    %v471 = vrot.slane %v470, 1
    %v472 = vmax.f32 %v470, %v471
    %v473 = vrot.slane %v436, 4
    %v474 = vmax.f32 %v436, %v473
    %v475 = vrot.slane %v474, 2
    %v476 = vmax.f32 %v474, %v475
    %v477 = vrot.slane %v476, 1
    %v478 = vmax.f32 %v476, %v477
    %v479 = vrot.slane %v437, 4
    %v480 = vmax.f32 %v437, %v479
    %v481 = vrot.slane %v480, 2
    %v482 = vmax.f32 %v480, %v481
    %v483 = vrot.slane %v482, 1
    %v484 = vmax.f32 %v482, %v483
    %v485 = vrot.slane %v438, 4
    %v486 = vmax.f32 %v438, %v485
    %v487 = vrot.slane %v486, 2
    %v488 = vmax.f32 %v486, %v487
    %v489 = vrot.slane %v488, 1
    %v490 = vmax.f32 %v488, %v489
    %v491 = vmax.f32 %v419, %v472
    %v492 = vmax.f32 %v420, %v478
    %v493 = vmax.f32 %v421, %v484
    %v494 = vmax.f32 %v422, %v490
    %v495 = vmul.f32 %v463, 0.03125
    %v496 = vmul.f32 %v464, 0.03125
    %v497 = vmul.f32 %v465, 0.03125
    %v498 = vmul.f32 %v466, 0.03125
    %v499 = vld [vmem:[#allocation5] sm:$0xff]
    %v500 = vld [vmem:[#allocation5 + $0x8] sm:$0xff]
    %v501 = vld [vmem:[#allocation5 + $0x10] sm:$0xff]
    %v502 = vld [vmem:[#allocation5 + $0x18] sm:$0xff]
    %v503 = vld [vmem:[#allocation5 + $0x20] sm:$0xff]
    %v504 = vld [vmem:[#allocation5 + $0x28] sm:$0xff]
    %v505 = vld [vmem:[#allocation5 + $0x30] sm:$0xff]
    %v506 = vld [vmem:[#allocation5 + $0x38] sm:$0xff]
    %v507 = vld [vmem:[#allocation5 + $0x40] sm:$0xff]
    %v508 = vld [vmem:[#allocation5 + $0x48] sm:$0xff]
    %v509 = vld [vmem:[#allocation5 + $0x50] sm:$0xff]
    %v510 = vld [vmem:[#allocation5 + $0x58] sm:$0xff]
    %v511 = vld [vmem:[#allocation5 + $0x60] sm:$0xff]
    %v512 = vld [vmem:[#allocation5 + $0x68] sm:$0xff]
    %v513 = vld [vmem:[#allocation5 + $0x70] sm:$0xff]
    %v514 = vld [vmem:[#allocation5 + $0x78] sm:$0xff]
    %v515 = vld [vmem:[#allocation5 + $0x80] sm:$0xff]
    %v516 = vld [vmem:[#allocation5 + $0x88] sm:$0xff]
    %v517 = vld [vmem:[#allocation5 + $0x90] sm:$0xff]
    %v518 = vld [vmem:[#allocation5 + $0x98] sm:$0xff]
    %v519 = vld [vmem:[#allocation5 + $0xa0] sm:$0xff]
    %v520 = vld [vmem:[#allocation5 + $0xa8] sm:$0xff]
    %v521 = vld [vmem:[#allocation5 + $0xb0] sm:$0xff]
    %v522 = vld [vmem:[#allocation5 + $0xb8] sm:$0xff]
    %v523 = vld [vmem:[#allocation5 + $0xc0] sm:$0xff]
    %v524 = vld [vmem:[#allocation5 + $0xc8] sm:$0xff]
    %v525 = vld [vmem:[#allocation5 + $0xd0] sm:$0xff]
    %v526 = vld [vmem:[#allocation5 + $0xd8] sm:$0xff]
    %v527 = vld [vmem:[#allocation5 + $0xe0] sm:$0xff]
    %v528 = vld [vmem:[#allocation5 + $0xe8] sm:$0xff]
    %v529 = vld [vmem:[#allocation5 + $0xf0] sm:$0xff]
    %v530 = vld [vmem:[#allocation5 + $0xf8] sm:$0xff]
    %v531 = vld [vmem:[#allocation5 + $0x100] sm:$0xff]
    %v532 = vld [vmem:[#allocation5 + $0x108] sm:$0xff]
    %v533 = vld [vmem:[#allocation5 + $0x110] sm:$0xff]
    %v534 = vld [vmem:[#allocation5 + $0x118] sm:$0xff]
    %v535 = vld [vmem:[#allocation5 + $0x120] sm:$0xff]
    %v536 = vld [vmem:[#allocation5 + $0x128] sm:$0xff]
    %v537 = vld [vmem:[#allocation5 + $0x130] sm:$0xff]
    %v538 = vld [vmem:[#allocation5 + $0x138] sm:$0xff]
    %v539 = vld [vmem:[#allocation5 + $0x140] sm:$0xff]
    %v540 = vld [vmem:[#allocation5 + $0x148] sm:$0xff]
    %v541 = vld [vmem:[#allocation5 + $0x150] sm:$0xff]
    %v542 = vld [vmem:[#allocation5 + $0x158] sm:$0xff]
    %v543 = vld [vmem:[#allocation5 + $0x160] sm:$0xff]
    %v544 = vld [vmem:[#allocation5 + $0x168] sm:$0xff]
    %v545 = vld [vmem:[#allocation5 + $0x170] sm:$0xff]
    %v546 = vld [vmem:[#allocation5 + $0x178] sm:$0xff]
    %v547 = vld [vmem:[#allocation5 + $0x180] sm:$0xff]
    %v548 = vld [vmem:[#allocation5 + $0x188] sm:$0xff]
    %v549 = vld [vmem:[#allocation5 + $0x190] sm:$0xff]
    %v550 = vld [vmem:[#allocation5 + $0x198] sm:$0xff]
    %v551 = vld [vmem:[#allocation5 + $0x1a0] sm:$0xff]
    %v552 = vld [vmem:[#allocation5 + $0x1a8] sm:$0xff]
    %v553 = vld [vmem:[#allocation5 + $0x1b0] sm:$0xff]
    %v554 = vld [vmem:[#allocation5 + $0x1b8] sm:$0xff]
    %v555 = vld [vmem:[#allocation5 + $0x1c0] sm:$0xff]
    %v556 = vld [vmem:[#allocation5 + $0x1c8] sm:$0xff]
    %v557 = vld [vmem:[#allocation5 + $0x1d0] sm:$0xff]
    %v558 = vld [vmem:[#allocation5 + $0x1d8] sm:$0xff]
    %v559 = vld [vmem:[#allocation5 + $0x1e0] sm:$0xff]
    %v560 = vld [vmem:[#allocation5 + $0x1e8] sm:$0xff]
    %v561 = vld [vmem:[#allocation5 + $0x1f0] sm:$0xff]
    %v562 = vld [vmem:[#allocation5 + $0x1f8] sm:$0xff]
    %s563 = scalar_lea.vmem [#allocation5], 512
    %v564 = vld [vmem:[%s563] sm:$0xff]
    %v565 = vld [vmem:[%s563 + $0x8] sm:$0xff]
    %v566 = vld [vmem:[%s563 + $0x10] sm:$0xff]
    %v567 = vld [vmem:[%s563 + $0x18] sm:$0xff]
    %v568 = vld [vmem:[%s563 + $0x20] sm:$0xff]
    %v569 = vld [vmem:[%s563 + $0x28] sm:$0xff]
    %v570 = vld [vmem:[%s563 + $0x30] sm:$0xff]
    %v571 = vld [vmem:[%s563 + $0x38] sm:$0xff]
    %v572 = vld [vmem:[%s563 + $0x40] sm:$0xff]
    %v573 = vld [vmem:[%s563 + $0x48] sm:$0xff]
    %v574 = vld [vmem:[%s563 + $0x50] sm:$0xff]
    %v575 = vld [vmem:[%s563 + $0x58] sm:$0xff]
    %v576 = vld [vmem:[%s563 + $0x60] sm:$0xff]
    %v577 = vld [vmem:[%s563 + $0x68] sm:$0xff]
    %v578 = vld [vmem:[%s563 + $0x70] sm:$0xff]
    %v579 = vld [vmem:[%s563 + $0x78] sm:$0xff]
    %v580 = vld [vmem:[%s563 + $0x80] sm:$0xff]
    %v581 = vld [vmem:[%s563 + $0x88] sm:$0xff]
    %v582 = vld [vmem:[%s563 + $0x90] sm:$0xff]
    %v583 = vld [vmem:[%s563 + $0x98] sm:$0xff]
    %v584 = vld [vmem:[%s563 + $0xa0] sm:$0xff]
    %v585 = vld [vmem:[%s563 + $0xa8] sm:$0xff]
    %v586 = vld [vmem:[%s563 + $0xb0] sm:$0xff]
    %v587 = vld [vmem:[%s563 + $0xb8] sm:$0xff]
    %v588 = vld [vmem:[%s563 + $0xc0] sm:$0xff]
    %v589 = vld [vmem:[%s563 + $0xc8] sm:$0xff]
    %v590 = vld [vmem:[%s563 + $0xd0] sm:$0xff]
    %v591 = vld [vmem:[%s563 + $0xd8] sm:$0xff]
    %v592 = vld [vmem:[%s563 + $0xe0] sm:$0xff]
    %v593 = vld [vmem:[%s563 + $0xe8] sm:$0xff]
    %v594 = vld [vmem:[%s563 + $0xf0] sm:$0xff]
    %v595 = vld [vmem:[%s563 + $0xf8] sm:$0xff]
    %v596 = vld [vmem:[%s563 + $0x100] sm:$0xff]
    %v597 = vld [vmem:[%s563 + $0x108] sm:$0xff]
    %v598 = vld [vmem:[%s563 + $0x110] sm:$0xff]
    %v599 = vld [vmem:[%s563 + $0x118] sm:$0xff]
    %v600 = vld [vmem:[%s563 + $0x120] sm:$0xff]
    %v601 = vld [vmem:[%s563 + $0x128] sm:$0xff]
    %v602 = vld [vmem:[%s563 + $0x130] sm:$0xff]
    %v603 = vld [vmem:[%s563 + $0x138] sm:$0xff]
    %v604 = vld [vmem:[%s563 + $0x140] sm:$0xff]
    %v605 = vld [vmem:[%s563 + $0x148] sm:$0xff]
    %v606 = vld [vmem:[%s563 + $0x150] sm:$0xff]
    %v607 = vld [vmem:[%s563 + $0x158] sm:$0xff]
    %v608 = vld [vmem:[%s563 + $0x160] sm:$0xff]
    %v609 = vld [vmem:[%s563 + $0x168] sm:$0xff]
    %v610 = vld [vmem:[%s563 + $0x170] sm:$0xff]
    %v611 = vld [vmem:[%s563 + $0x178] sm:$0xff]
    %v612 = vld [vmem:[%s563 + $0x180] sm:$0xff]
    %v613 = vld [vmem:[%s563 + $0x188] sm:$0xff]
    %v614 = vld [vmem:[%s563 + $0x190] sm:$0xff]
    %v615 = vld [vmem:[%s563 + $0x198] sm:$0xff]
    %v616 = vld [vmem:[%s563 + $0x1a0] sm:$0xff]
    %v617 = vld [vmem:[%s563 + $0x1a8] sm:$0xff]
    %v618 = vld [vmem:[%s563 + $0x1b0] sm:$0xff]
    %v619 = vld [vmem:[%s563 + $0x1b8] sm:$0xff]
    %v620 = vld [vmem:[%s563 + $0x1c0] sm:$0xff]
    %v621 = vld [vmem:[%s563 + $0x1c8] sm:$0xff]
    %v622 = vld [vmem:[%s563 + $0x1d0] sm:$0xff]
    %v623 = vld [vmem:[%s563 + $0x1d8] sm:$0xff]
    %v624 = vld [vmem:[%s563 + $0x1e0] sm:$0xff]
    %v625 = vld [vmem:[%s563 + $0x1e8] sm:$0xff]
    %v626 = vld [vmem:[%s563 + $0x1f0] sm:$0xff]
    %v627 = vld [vmem:[%s563 + $0x1f8] sm:$0xff]
    %v632 = vsel %vm139, %v493, %v491
    %v633 = vsel %vm139, %v494, %v492
    %636 = vmatpush.msra.mxu0 %v594
    %637 = vmatpush.msra.mxu0 %v592
    %638 = vmatpush.msra.mxu0 %v590
    %639 = vmatpush.msra.mxu0 %v588
    %640 = vmatpush.msra.mxu0 %v586
    %641 = vmatpush.msra.mxu0 %v584
    %642 = vmatpush.msra.mxu0 %v582
    %643 = vmatpush.msra.mxu0 %v580
    %644 = vmatpush.msra.mxu0 %v578
    %645 = vmatpush.msra.mxu0 %v576
    %646 = vmatpush.msra.mxu0 %v574
    %647 = vmatpush.msra.mxu0 %v572
    %648 = vmatpush.msra.mxu0 %v570
    %649 = vmatpush.msra.mxu0 %v568
    %650 = vmatpush.msra.mxu0 %v566
    %651 = vmatpush.msra.mxu0 %v564
    %652 = vmatmul.f32.gmra.mxu0 %v632
    %v653 = vpop.f32.mrf.mxu0
    %v654 = vadd.f32 0.0, %v653
    %655 = vdwg.mxu0
    %656 = vmatpush.msra.mxu0 %v626
    %657 = vmatpush.msra.mxu0 %v624
    %658 = vmatpush.msra.mxu0 %v622
    %659 = vmatpush.msra.mxu0 %v620
    %660 = vmatpush.msra.mxu0 %v618
    %661 = vmatpush.msra.mxu0 %v616
    %662 = vmatpush.msra.mxu0 %v614
    %663 = vmatpush.msra.mxu0 %v612
    %664 = vmatpush.msra.mxu0 %v610
    %665 = vmatpush.msra.mxu0 %v608
    %666 = vmatpush.msra.mxu0 %v606
    %667 = vmatpush.msra.mxu0 %v604
    %668 = vmatpush.msra.mxu0 %v602
    %669 = vmatpush.msra.mxu0 %v600
    %670 = vmatpush.msra.mxu0 %v598
    %671 = vmatpush.msra.mxu0 %v596
    %672 = vmatmul.f32.gmra.mxu0 %v633
    %v673 = vpop.f32.mrf.mxu0
    %v674 = vadd.f32 %v654, %v673
    %675 = vdwg.mxu0
    %676 = vmatpush.msra.mxu0 %v595
    %677 = vmatpush.msra.mxu0 %v593
    %678 = vmatpush.msra.mxu0 %v591
    %679 = vmatpush.msra.mxu0 %v589
    %680 = vmatpush.msra.mxu0 %v587
    %681 = vmatpush.msra.mxu0 %v585
    %682 = vmatpush.msra.mxu0 %v583
    %683 = vmatpush.msra.mxu0 %v581
    %684 = vmatpush.msra.mxu0 %v579
    %685 = vmatpush.msra.mxu0 %v577
    %686 = vmatpush.msra.mxu0 %v575
    %687 = vmatpush.msra.mxu0 %v573
    %688 = vmatpush.msra.mxu0 %v571
    %689 = vmatpush.msra.mxu0 %v569
    %690 = vmatpush.msra.mxu0 %v567
    %691 = vmatpush.msra.mxu0 %v565
    %692 = vmatmul.f32.gmra.mxu0 %v632
    %v693 = vpop.f32.mrf.mxu0
    %v694 = vadd.f32 0.0, %v693
    %695 = vdwg.mxu0
    %696 = vmatpush.msra.mxu0 %v627
    %697 = vmatpush.msra.mxu0 %v625
    %698 = vmatpush.msra.mxu0 %v623
    %699 = vmatpush.msra.mxu0 %v621
    %700 = vmatpush.msra.mxu0 %v619
    %701 = vmatpush.msra.mxu0 %v617
    %702 = vmatpush.msra.mxu0 %v615
    %703 = vmatpush.msra.mxu0 %v613
    %704 = vmatpush.msra.mxu0 %v611
    %705 = vmatpush.msra.mxu0 %v609
    %706 = vmatpush.msra.mxu0 %v607
    %707 = vmatpush.msra.mxu0 %v605
    %708 = vmatpush.msra.mxu0 %v603
    %709 = vmatpush.msra.mxu0 %v601
    %710 = vmatpush.msra.mxu0 %v599
    %711 = vmatpush.msra.mxu0 %v597
    %712 = vmatmul.f32.gmra.mxu0 %v633
    %v713 = vpop.f32.mrf.mxu0
    %v714 = vadd.f32 %v694, %v713
    %715 = vdwg.mxu0
    %v720 = vsel %vm139, %v497, %v495
    %v721 = vsel %vm139, %v498, %v496
    %724 = vmatpush.msra.mxu0 %v529
    %725 = vmatpush.msra.mxu0 %v527
    %726 = vmatpush.msra.mxu0 %v525
    %727 = vmatpush.msra.mxu0 %v523
    %728 = vmatpush.msra.mxu0 %v521
    %729 = vmatpush.msra.mxu0 %v519
    %730 = vmatpush.msra.mxu0 %v517
    %731 = vmatpush.msra.mxu0 %v515
    %732 = vmatpush.msra.mxu0 %v513
    %733 = vmatpush.msra.mxu0 %v511
    %734 = vmatpush.msra.mxu0 %v509
    %735 = vmatpush.msra.mxu0 %v507
    %736 = vmatpush.msra.mxu0 %v505
    %737 = vmatpush.msra.mxu0 %v503
    %738 = vmatpush.msra.mxu0 %v501
    %739 = vmatpush.msra.mxu0 %v499
    %740 = vmatmul.f32.gmra.mxu0 %v720
    %v741 = vpop.f32.mrf.mxu0
    %v742 = vadd.f32 %v674, %v741
    %743 = vdwg.mxu0
    %744 = vmatpush.msra.mxu0 %v561
    %745 = vmatpush.msra.mxu0 %v559
    %746 = vmatpush.msra.mxu0 %v557
    %747 = vmatpush.msra.mxu0 %v555
    %748 = vmatpush.msra.mxu0 %v553
    %749 = vmatpush.msra.mxu0 %v551
    %750 = vmatpush.msra.mxu0 %v549
    %751 = vmatpush.msra.mxu0 %v547
    %752 = vmatpush.msra.mxu0 %v545
    %753 = vmatpush.msra.mxu0 %v543
    %754 = vmatpush.msra.mxu0 %v541
    %755 = vmatpush.msra.mxu0 %v539
    %756 = vmatpush.msra.mxu0 %v537
    %757 = vmatpush.msra.mxu0 %v535
    %758 = vmatpush.msra.mxu0 %v533
    %759 = vmatpush.msra.mxu0 %v531
    %760 = vmatmul.f32.gmra.mxu0 %v721
    %v761 = vpop.f32.mrf.mxu0
    %v762 = vadd.f32 %v742, %v761
    %763 = vdwg.mxu0
    %764 = vmatpush.msra.mxu0 %v530
    %765 = vmatpush.msra.mxu0 %v528
    %766 = vmatpush.msra.mxu0 %v526
    %767 = vmatpush.msra.mxu0 %v524
    %768 = vmatpush.msra.mxu0 %v522
    %769 = vmatpush.msra.mxu0 %v520
    %770 = vmatpush.msra.mxu0 %v518
    %771 = vmatpush.msra.mxu0 %v516
    %772 = vmatpush.msra.mxu0 %v514
    %773 = vmatpush.msra.mxu0 %v512
    %774 = vmatpush.msra.mxu0 %v510
    %775 = vmatpush.msra.mxu0 %v508
    %776 = vmatpush.msra.mxu0 %v506
    %777 = vmatpush.msra.mxu0 %v504
    %778 = vmatpush.msra.mxu0 %v502
    %779 = vmatpush.msra.mxu0 %v500
    %780 = vmatmul.f32.gmra.mxu0 %v720
    %v781 = vpop.f32.mrf.mxu0
    %v782 = vadd.f32 %v714, %v781
    %783 = vdwg.mxu0
    %784 = vmatpush.msra.mxu0 %v562
    %785 = vmatpush.msra.mxu0 %v560
    %786 = vmatpush.msra.mxu0 %v558
    %787 = vmatpush.msra.mxu0 %v556
    %788 = vmatpush.msra.mxu0 %v554
    %789 = vmatpush.msra.mxu0 %v552
    %790 = vmatpush.msra.mxu0 %v550
    %791 = vmatpush.msra.mxu0 %v548
    %792 = vmatpush.msra.mxu0 %v546
    %793 = vmatpush.msra.mxu0 %v544
    %794 = vmatpush.msra.mxu0 %v542
    %795 = vmatpush.msra.mxu0 %v540
    %796 = vmatpush.msra.mxu0 %v538
    %797 = vmatpush.msra.mxu0 %v536
    %798 = vmatpush.msra.mxu0 %v534
    %799 = vmatpush.msra.mxu0 %v532
    %800 = vmatmul.f32.gmra.mxu0 %v721
    %v801 = vpop.f32.mrf.mxu0
    %v802 = vadd.f32 %v782, %v801
    %803 = vdwg.mxu0
    %v804 = vxor.u32 %v762, 2147483648
    %v805 = vxor.u32 %v802, 2147483648
    %v806 = vmul.f32 %v804, 1.442695
    %v807 = vpow.pop %v806
    %v808 = vmul.f32 %v805, 1.442695
    %v809 = vpow.pop %v808
    %v810 = vadd.f32 %v807, 1.0
    %v811 = vadd.f32 %v809, 1.0
    %v812 = vrcp.pop %v810
    %v813 = vmul.f32 %v810, %v812
    %v814 = vsub.f32 1.0, %v813
    %v815 = vmul.f32 %v812, %v814
    %v816 = vadd.f32 %v812, %v815
    %vm817 = vweird.f32 %v810
    %vm818 = vweird.f32 %v812
    %vm819 = vmor %vm817, %vm818
    %v820 = vsel %vm819, %v812, %v816
    %v821 = vand.u32 2147483647, %v810
    %vm822 = vcmp.eq.f32.partialorder %v821, 8.507059e+37
    %v823 = vand.u32 %v810, 2147483648
    %v824 = vor.u32 1.1754944e-38, %v823
    %v825 = vsel %vm822, %v824, %v820
    %v826 = vmul.f32 1.0, %v825
    %v827 = vrcp.pop %v811
    %v828 = vmul.f32 %v811, %v827
    %v829 = vsub.f32 1.0, %v828
    %v830 = vmul.f32 %v827, %v829
    %v831 = vadd.f32 %v827, %v830
    %vm832 = vweird.f32 %v811
    %vm833 = vweird.f32 %v827
    %vm834 = vmor %vm832, %vm833
    %v835 = vsel %vm834, %v827, %v831
    %v836 = vand.u32 2147483647, %v811
    %vm837 = vcmp.eq.f32.partialorder %v836, 8.507059e+37
    %v838 = vand.u32 %v811, 2147483648
    %v839 = vor.u32 1.1754944e-38, %v838
    %v840 = vsel %vm837, %v839, %v835
    %v841 = vmul.f32 1.0, %v840
    %v844 = vrot.slane %v841, 7
    %vm845 = vcmask 1040384
    %v846 = vsel %vm845, %v826, %v844
    %v847 = vsel %vm139, %v826, %v844
    %v848 = vrot.slane %v847, 1
    %v849 = vperm.slane %v846, 0
    %v850 = vperm.slane %v846, 1
    %v851 = vperm.slane %v848, 0
    %v852 = vperm.slane %v848, 1
    %v857 = vmul.f32 %v215, %v849
    %v858 = vmul.f32 %v215, %v850
    %v859 = vmul.f32 %v284, %v849
    %v860 = vmul.f32 %v284, %v850
    %v861 = vmul.f32 %v356, %v849
    %v862 = vmul.f32 %v356, %v850
    %v863 = vmul.f32 %v428, %v849
    %v864 = vmul.f32 %v428, %v850
    %v865 = vmul.f32 %v222, %v851
    %v866 = vmul.f32 %v222, %v852
    %v867 = vmul.f32 %v290, %v851
    %v868 = vmul.f32 %v290, %v852
    %v869 = vmul.f32 %v362, %v851
    %v870 = vmul.f32 %v362, %v852
    %v871 = vmul.f32 %v434, %v851
    %v872 = vmul.f32 %v434, %v852
    %v873 = vmul.f32 %v50, %v857
    %v874 = vmul.f32 %v51, %v858
    %v875 = vmul.f32 %v52, %v859
    %v876 = vmul.f32 %v53, %v860
    %v877 = vmul.f32 %v54, %v861
    %v878 = vmul.f32 %v55, %v862
    %v879 = vmul.f32 %v56, %v863
    %v880 = vmul.f32 %v57, %v864
    %v881 = vmul.f32 %v58, %v865
    %v882 = vmul.f32 %v59, %v866
    %v883 = vmul.f32 %v60, %v867
    %v884 = vmul.f32 %v61, %v868
    %v885 = vmul.f32 %v62, %v869
    %v886 = vmul.f32 %v63, %v870
    %v887 = vmul.f32 %v64, %v871
    %v888 = vmul.f32 %v65, %v872
    %889 = vst [vmem:[#allocation7] sm:$0xff] %v873
    %890 = vst [vmem:[#allocation7 + $0x8] sm:$0xff] %v874
    %891 = vst [vmem:[#allocation7 + $0x10] sm:$0xff] %v875
    %892 = vst [vmem:[#allocation7 + $0x18] sm:$0xff] %v876
    %893 = vst [vmem:[#allocation7 + $0x20] sm:$0xff] %v877
    %894 = vst [vmem:[#allocation7 + $0x28] sm:$0xff] %v878
    %895 = vst [vmem:[#allocation7 + $0x30] sm:$0xff] %v879
    %896 = vst [vmem:[#allocation7 + $0x38] sm:$0xff] %v880
    %897 = vst [vmem:[#allocation7 + $0x40] sm:$0xff] %v881
    %898 = vst [vmem:[#allocation7 + $0x48] sm:$0xff] %v882
    %899 = vst [vmem:[#allocation7 + $0x50] sm:$0xff] %v883
    %900 = vst [vmem:[#allocation7 + $0x58] sm:$0xff] %v884
    %901 = vst [vmem:[#allocation7 + $0x60] sm:$0xff] %v885
    %902 = vst [vmem:[#allocation7 + $0x68] sm:$0xff] %v886
    %903 = vst [vmem:[#allocation7 + $0x70] sm:$0xff] %v887
    %904 = vst [vmem:[#allocation7 + $0x78] sm:$0xff] %v888
    // Predicated region
    $region26: #{tpu_custom_call.1} parent=1 // pred_check
      _
    $region27: #{tpu_custom_call.1} parent=1 // pred_check_branch
      %906 = sbr.rel (0) target = $region29
    $region28: #{tpu_custom_call.1} parent=1 // pred_region
      %908 = vsyncadd [#allocation4], 0
      %s909 = sshll.u32 [#allocation7], 4
      %s910 = int_to_ptr.vmem [resolvable:$true] %s909
      %s911 = sshll.u32 %s4, 4
      %s912 = int_to_ptr.hbm [resolvable:$true] %s911
      %917 = dma.vmem_to_hbm [thread:$0]  %s910, 2048, %s912, [#allocation4], 256, 256, 16
    $region29: #{tpu_custom_call.1} parent=1 // pred_fallthru
      _
    // Predicated region
    $region30: #{tpu_custom_call.1} parent=1 // pred_check
      _
    $region31: #{tpu_custom_call.1} parent=1 // pred_check_branch
      %919 = sbr.rel (0) target = $region33
    $region32: #{tpu_custom_call.1} parent=1 // pred_region
      %921 = dma.done [#allocation4], 2048
    $region33: #{tpu_custom_call.1} parent=1 // pred_fallthru
      _
    %922 = vsyncpa [#allocation3], 1
    %923 = vsyncpa [#allocation6], 1
    %924 = vsyncpa [#allocation4], 1

</llo_original>
